<compile_context>
chip_gen: v5e
topology: v5e:2x2
jax: 0.10.0
libtpu: 0.0.40
codegen_flags: <defaults>
</compile_context>

<pallas_src>
import itertools

import jax
import jax.numpy as jnp
from jax import lax
from jax.experimental import pallas as pl
from jax.experimental.pallas import tpu as pltpu

# Small demo dims (torch defaults are 300/128; shrunk, semantics identical).
EMB_DIM = 64       # embedding_dim
STATE_DIM = 64     # state_dim (== self.input_state for mem_type='sum')
H_ACT = 64         # hidden_dim_action
H_ST = 64          # hidden_dim_state
H_SC = 128         # hidden_dim_scorer

MAX_TILE_ROWS = 4096   # <~10 MiB VMEM per tile -> fits every TPU generation
MIN_TILE_ROWS = 256    # multiple of 256 keeps (8,128) block constraints happy


def _round_up(x, m):
    return ((x + m - 1) // m) * m


def _choose_tile_rows(n):
    """(state, action)-pair rows per grid step.  Large tiles amortize the
    ~0.35us/step overhead; capped at ceil(n/2) (rounded up to 256) so that the
    'parallel' row axis has >= 2 tiles once n is big enough (v7x dual TC)."""
    half = _round_up(pl.cdiv(max(n, 1), 2), MIN_TILE_ROWS)
    return int(min(MAX_TILE_ROWS, max(MIN_TILE_ROWS, half)))


# ------------------------------- kernels ------------------------------------

def _state_mlp_kernel(s_ref, ws_ref, bs_ref, o_ref):
    """State MLP on the B unique states (single grid step, tiny)."""
    f = jnp.dot(s_ref[...], ws_ref[...], preferred_element_type=jnp.float32)
    o_ref[...] = jnp.maximum(f + bs_ref[...], 0.0).astype(o_ref.dtype)


def _drrn_scorer_kernel(sfeat_ref, act_ref, wa_ref, ba_ref, wzs_ref, wza_ref,
                        bz_ref, wot_ref, bo_ref, out_ref):
    """Action MLP + scorer for one tile of (state, action)-pair rows."""
    # action MLP: (TILE, E) @ (E, Ha); bias-add / ReLU in f32
    a = jnp.dot(act_ref[...], wa_ref[...], preferred_element_type=jnp.float32)
    a = jnp.maximum(a + ba_ref[...], 0.0)
    # scorer hidden layer; split-wz form of concat([s_feat, a_feat]) @ wz (exact)
    h = jnp.dot(sfeat_ref[...], wzs_ref[...], preferred_element_type=jnp.float32)
    h = h + jnp.dot(a.astype(jnp.bfloat16), wza_ref[...],
                    preferred_element_type=jnp.float32)
    h = jnp.maximum(h + bz_ref[...], 0.0)
    # scorer head: (1, Hsc) contracted with h's feature axis -> lane-dense
    # (1, TILE) row of Q-values (unmasked full-lane stores).
    q = lax.dot_general(wot_ref[...], h.astype(jnp.bfloat16),
                        dimension_numbers=(((1,), (1,)), ((), ())),
                        preferred_element_type=jnp.float32)
    out_ref[...] = (q + bo_ref[0, 0]).reshape(1, 1, out_ref.shape[-1])


# ------------------------------ parameters ----------------------------------

def init_params(key):
    """Deterministic init mimicking nn.Linear's uniform(-1/sqrt(fan_in), ...)."""
    def lin(k, fan_in, fan_out):
        bound = 1.0 / (fan_in ** 0.5)
        kw, kb = jax.random.split(k)
        w = jax.random.uniform(kw, (fan_in, fan_out), jnp.float32, -bound, bound)
        b = jax.random.uniform(kb, (1, fan_out), jnp.float32, -bound, bound)
        return w, b

    ks = jax.random.split(key, 4)
    wa, ba = lin(ks[0], EMB_DIM, H_ACT)                 # self.action[0]
    ws, bs = lin(ks[1], STATE_DIM, H_ST)                # self.state[0]
    wz, bz = lin(ks[2], H_ST + H_ACT, H_SC)             # self.scorer[0]
    wo, bo = lin(ks[3], H_SC, 1)                        # self.scorer[-1]
    return dict(wa=wa, ba=ba, ws=ws, bs=bs, wz=wz, bz=bz, wo=wo, bo=bo)


def pack_params(p):
    """Split wz into its state-/action-feature halves (exact rewrite of the
    concat matmul) and cast matmul operands to bf16 (biases stay f32).
    At real torch dims, additionally zero-pad feature axes here: contraction
    dims >128 to multiples of 256 on v6e/v7x, multiples of 128 on v5e."""
    hs = p["ws"].shape[1]
    return dict(
        ws=p["ws"].astype(jnp.bfloat16),            # (STATE_DIM, H_ST)
        bs=p["bs"],                                 # (1, H_ST)  f32
        wa=p["wa"].astype(jnp.bfloat16),            # (EMB_DIM, H_ACT)
        ba=p["ba"],                                 # (1, H_ACT) f32
        wzs=p["wz"][:hs].astype(jnp.bfloat16),      # (H_ST, H_SC)  state half
        wza=p["wz"][hs:].astype(jnp.bfloat16),      # (H_ACT, H_SC) action half
        bz=p["bz"],                                 # (1, H_SC)  f32
        wot=p["wo"].T.astype(jnp.bfloat16),         # (1, H_SC)
        bo=p["bo"],                                 # (1, 1) f32 -> SMEM scalar
    )


# -------------------------------- forward -----------------------------------

def drrn_forward(packed, state_batch, act_batch):
    """mem_type='sum' forward.  state_batch: list of (1, STATE_DIM) arrays;
    act_batch: list (per state) of lists of (1, EMB_DIM) arrays.
    Returns (tuple_of_per_state_q_values, new_state=None)."""
    act_sizes = [len(a) for a in act_batch]          # intended per-state counts
    states = jnp.concatenate([jnp.asarray(s, jnp.float32) for s in state_batch], 0)
    acts = jnp.concatenate(
        [jnp.asarray(x, jnp.float32)
         for x in itertools.chain.from_iterable(act_batch)], 0)
    b = states.shape[0]
    n = acts.shape[0]

    # ---- tiny pre-pass: state MLP on the B unique states (single grid step)
    b_pad = _round_up(max(b, 1), 8)
    states_p = jnp.pad(states, ((0, b_pad - b), (0, 0))).astype(jnp.bfloat16)
    sfeat = pl.pallas_call(
        _state_mlp_kernel,
        out_shape=jax.ShapeDtypeStruct((b_pad, H_ST), jnp.bfloat16),
        grid=(1,),
        in_specs=[pl.BlockSpec((b_pad, STATE_DIM), lambda i: (0, 0)),
                  pl.BlockSpec((STATE_DIM, H_ST), lambda i: (0, 0)),
                  pl.BlockSpec((1, H_ST), lambda i: (0, 0))],
        out_specs=pl.BlockSpec((b_pad, H_ST), lambda i: (0, 0)),
    )(states_p, packed["ws"], packed["bs"])

    # Repeat the post-MLP state FEATURES once per action of that state (exact:
    # Linear/ReLU are row-wise), instead of repeating raw states.
    sfeat_rep = jnp.repeat(sfeat[:b], jnp.asarray(act_sizes), axis=0,
                           total_repeat_length=n)

    tile_rows = _choose_tile_rows(n)
    n_pad = pl.cdiv(n, tile_rows) * tile_rows
    n_tiles = n_pad // tile_rows
    sfeat_rep = jnp.pad(sfeat_rep, ((0, n_pad - n), (0, 0)))
    acts_b = jnp.pad(acts.astype(jnp.bfloat16), ((0, n_pad - n), (0, 0)))

    flops = 2 * n_pad * (EMB_DIM * H_ACT + H_ST * H_SC + H_ACT * H_SC + H_SC)
    bytes_accessed = (n_pad * (H_ST + EMB_DIM) * 2                      # rows (bf16)
                      + (EMB_DIM * H_ACT + H_ST * H_SC + H_ACT * H_SC
                         + H_SC) * 2                                    # bf16 weights
                      + (H_ACT + H_SC + 1) * 4                          # f32 biases
                      + n_pad * 4)                                      # f32 output

    full = lambda shape: pl.BlockSpec(shape, lambda i: (0,) * len(shape))

    scores = pl.pallas_call(
        _drrn_scorer_kernel,
        out_shape=jax.ShapeDtypeStruct((n_tiles, 1, tile_rows), jnp.float32),
        grid_spec=pltpu.PrefetchScalarGridSpec(
            num_scalar_prefetch=0,
            grid=(n_tiles,),
            in_specs=[
                pl.BlockSpec((tile_rows, H_ST), lambda i: (i, 0)),    # state feats
                pl.BlockSpec((tile_rows, EMB_DIM), lambda i: (i, 0)), # action embs
                full((EMB_DIM, H_ACT)), full((1, H_ACT)),             # action MLP
                full((H_ST, H_SC)), full((H_ACT, H_SC)),              # split wz
                full((1, H_SC)),                                      # bz
                full((1, H_SC)),                                      # wo^T
                pl.BlockSpec(memory_space=pltpu.MemorySpace.SMEM),    # bo scalar
            ],
            out_specs=pl.BlockSpec((1, 1, tile_rows), lambda i: (i, 0, 0)),
        ),
        compiler_params=pltpu.CompilerParams(
            dimension_semantics=("parallel",)),
        cost_estimate=pl.CostEstimate(flops=flops, transcendentals=0,
                                      bytes_accessed=bytes_accessed),
    )(sfeat_rep, acts_b, packed["wa"], packed["ba"], packed["wzs"],
      packed["wza"], packed["bz"], packed["wot"], packed["bo"])

    act_values = scores.reshape(-1)[:n]               # z.squeeze(-1); drop pad rows
    splits = list(itertools.accumulate(act_sizes))[:-1]
    return tuple(jnp.split(act_values, splits)), None  # new_state = None


# ------------------------------- references ---------------------------------

def _ref_unfused_f32(p, acts, st_rep):
    """Original module structure (separate MLPs, concat, scorer) in f32."""
    a = jnp.maximum(acts @ p["wa"] + p["ba"], 0.0)
    s = jnp.maximum(st_rep @ p["ws"] + p["bs"], 0.0)
    z = jnp.concatenate([s, a], axis=1)
    h = jnp.maximum(z @ p["wz"] + p["bz"], 0.0)
    return (h @ p["wo"] + p["bo"])[:, 0]


def _ref_packed_bf16(pp, st_rep, acts):
    """Same numerics as the kernels (bf16 matmul operands, f32 accumulation)."""
    s = jnp.maximum(jnp.dot(st_rep.astype(jnp.bfloat16), pp["ws"],
                            preferred_element_type=jnp.float32) + pp["bs"], 0.0)
    s = s.astype(jnp.bfloat16)
    a = jnp.maximum(jnp.dot(acts.astype(jnp.bfloat16), pp["wa"],
                            preferred_element_type=jnp.float32) + pp["ba"], 0.0)
    h = (jnp.dot(s, pp["wzs"], preferred_element_type=jnp.float32)
         + jnp.dot(a.astype(jnp.bfloat16), pp["wza"],
                   preferred_element_type=jnp.float32))
    h = jnp.maximum(h + pp["bz"], 0.0)
    q = jnp.dot(h.astype(jnp.bfloat16), pp["wot"].T,
                preferred_element_type=jnp.float32) + pp["bo"]
    return q[:, 0]


if __name__ == "__main__":
    key = jax.random.PRNGKey(0)
    kp, ks, ka = jax.random.split(key, 3)
    params = init_params(kp)
    packed = pack_params(params)

    B, A = 2, 8                                      # 2 states, 8 actions each
    state_raw = jax.random.normal(ks, (B, 1, STATE_DIM), jnp.float32)
    act_raw = jax.random.normal(ka, (B, A, 1, EMB_DIM), jnp.float32)

    state_batch = [state_raw[i] for i in range(B)]                     # (1, S) each
    act_batch = [[act_raw[i, j] for j in range(A)] for i in range(B)]  # (1, E) each

    q_values, new_state = drrn_forward(packed, state_batch, act_batch)
    q_values = jax.block_until_ready(q_values)

    # correctness checks against plain-JAX references
    acts = jnp.concatenate(
        [x for x in itertools.chain.from_iterable(act_batch)], 0)
    st_rep = jnp.repeat(jnp.concatenate(state_batch, 0),
                        jnp.asarray([A] * B), axis=0, total_repeat_length=B * A)
    got = jnp.concatenate(q_values, 0)

    ref_same = _ref_packed_bf16(packed, st_rep, acts)
    ref_f32 = _ref_unfused_f32(params, acts, st_rep)

    assert got.shape == (B * A,)
    assert new_state is None
    assert jnp.allclose(got, ref_same, atol=1e-2, rtol=1e-2)  # kernel vs same-numerics ref
    assert jnp.allclose(got, ref_f32, atol=1e-1, rtol=1e-1)   # bf16 vs f32 semantic check

    # TODO(synk): mem_type='lstm' / attention / act() sampling branches are not
    # exercised for mem_type='sum' and are not implemented as Pallas kernels.

    print("KERNEL_OK")
</pallas_src>

<mosaic_0001>
module attributes {stable_mosaic.version = 11 : i64} {
  func.func @_state_mlp_kernel(%arg0: i32, %arg1: memref<8x64xbf16, #tpu.memory_space<vmem>>, %arg2: memref<64x64xbf16, #tpu.memory_space<vmem>>, %arg3: memref<1x64xf32, #tpu.memory_space<vmem>>, %arg4: memref<8x64xbf16, #tpu.memory_space<vmem>>) attributes {dimension_semantics = [#tpu.dimension_semantics<arbitrary>], iteration_bounds = array<i64: 1>, scalar_prefetch = 0 : i64, scratch_operands = 0 : i64, tpu.core_type = #tpu.core_type<tc>, window_params = [{pipeline_mode = #tpu.pipeline_mode<synchronous>, transform_indices = @transform_0, window_bounds = array<i64: 8, 64>}, {pipeline_mode = #tpu.pipeline_mode<synchronous>, transform_indices = @transform_1, window_bounds = array<i64: 64, 64>}, {pipeline_mode = #tpu.pipeline_mode<synchronous>, transform_indices = @transform_2, window_bounds = array<i64: 1, 64>}, {pipeline_mode = #tpu.pipeline_mode<synchronous>, transform_indices = @transform_3, window_bounds = array<i64: 8, 64>}]} {
    %c0 = arith.constant 0 : index
    %c0_0 = arith.constant 0 : index
    %0 = vector.load %arg1[%c0, %c0_0] : memref<8x64xbf16, #tpu.memory_space<vmem>>, vector<8x64xbf16>
    %c0_1 = arith.constant 0 : index
    %c0_2 = arith.constant 0 : index
    %1 = vector.load %arg2[%c0_1, %c0_2] : memref<64x64xbf16, #tpu.memory_space<vmem>>, vector<64x64xbf16>
    %cst = arith.constant dense<0.000000e+00> : vector<8x64xf32>
    %2 = tpu.matmul %0, %1, %cst {dimension_numbers = #tpu.dot_dimension_numbers<[1], [0], [0], [1], [0, 0, 1, 1], [], []>} : vector<8x64xbf16>, vector<64x64xbf16>, vector<8x64xf32> -> vector<8x64xf32>
    %c0_3 = arith.constant 0 : index
    %c0_4 = arith.constant 0 : index
    %3 = vector.load %arg3[%c0_3, %c0_4] : memref<1x64xf32, #tpu.memory_space<vmem>>, vector<1x64xf32>
    %4 = vector.broadcast %3 : vector<1x64xf32> to vector<8x64xf32>
    %5 = arith.addf %2, %4 : vector<8x64xf32>
    %cst_5 = arith.constant 0.000000e+00 : f32
    %6 = vector.broadcast %cst_5 : f32 to vector<8x64xf32>
    %7 = arith.maximumf %5, %6 : vector<8x64xf32>
    %8 = arith.truncf %7 : vector<8x64xf32> to vector<8x64xbf16>
    %c0_6 = arith.constant 0 : index
    %c0_7 = arith.constant 0 : index
    %9 = vector.load %arg4[%c0_6, %c0_7] : memref<8x64xbf16, #tpu.memory_space<vmem>>, vector<8x64xbf16>
    tpu.vector_store %arg4[%c0_6, %c0_7], %8 {strides = array<i32>} : memref<8x64xbf16, #tpu.memory_space<vmem>>, vector<8x64xbf16>,
    return
  }
  func.func @transform_0(%arg0: i32) -> (i32, i32) {
    %c0_i32 = arith.constant 0 : i32
    %c0_i32_0 = arith.constant 0 : i32
    %c0_i32_1 = arith.constant 0 : i32
    return %c0_i32, %c0_i32_0 : i32, i32
  }
  func.func @transform_1(%arg0: i32) -> (i32, i32) {
    %c0_i32 = arith.constant 0 : i32
    %c0_i32_0 = arith.constant 0 : i32
    %c0_i32_1 = arith.constant 0 : i32
    return %c0_i32, %c0_i32_0 : i32, i32
  }
  func.func @transform_2(%arg0: i32) -> (i32, i32) {
    %c0_i32 = arith.constant 0 : i32
    %c0_i32_0 = arith.constant 0 : i32
    %c0_i32_1 = arith.constant 0 : i32
    return %c0_i32, %c0_i32_0 : i32, i32
  }
  func.func @transform_3(%arg0: i32) -> (i32, i32) {
    %c0_i32 = arith.constant 0 : i32
    %c0_i32_0 = arith.constant 0 : i32
    %c0_i32_1 = arith.constant 0 : i32
    return %c0_i32, %c0_i32_0 : i32, i32
  }
}

</mosaic_0001>

<llo_original>
// kernel: tpu_custom_call.1
$region0: #{tpu_custom_call.1}
  #allocation0 [shape = 'u32[]', space=smem, size = 0x4, offset = 0x4, fixed_abs, tag = 'smem constant byte address 0x4 - core index']
  #allocation1 [shape = 'u32[72,128]{1,0:T(1,128)}', space=vmem, size = 0x9000, scoped, tag = 'internal scratch']
  %s0 = inlined_call_operand.hbm [shape: bf16[8,64], index: 0, kind: input, shape index: {}]
  %s1 = inlined_call_operand.hbm [shape: bf16[64,64], index: 1, kind: input, shape index: {}]
  %s2 = inlined_call_operand.vmem [shape: f32[1,64], index: 2, kind: input, shape index: {}]
  %s3 = inlined_call_operand.hbm [shape: bf16[8,64], index: 3, kind: output, shape index: {}]
  %s4 = sld [smem:[#allocation0]]
  $region30: #{tpu_custom_call.1} parent=0
    _
  %s6 = ssub.s32 1, %s4
  %s7 = scalar_select 0, %s6, %s4
  $region1: #{tpu_custom_call.1} parent=0
    #allocation2 [shape = 'u8[2048]{0}', space=vmem, size = 0x800, scoped, tag = 'input window, operand 0, single buffered']
    #allocation3 [shape = 's32[1]{0}', space=sflag, size = 0x4, scoped, tag = 'scoped memory for tpu_custom_call.1']
    #allocation4 [shape = 's32[1]{0}', space=sflag, size = 0x4, scoped, tag = 'scoped memory for tpu_custom_call.1']
    #allocation5 [shape = 'u8[16384]{0}', space=vmem, size = 0x4000, scoped, tag = 'input window, operand 1, single buffered']
    #allocation6 [shape = 's32[1]{0}', space=sflag, size = 0x4, scoped, tag = 'scoped memory for tpu_custom_call.1']
    #allocation7 [shape = 'u8[2048]{0}', space=vmem, size = 0x800, scoped, tag = 'output window, operand 0, single buffered']
    %8 = vsyncpa [#allocation3], 0
    %9 = vsyncpa [#allocation6], 0
    %10 = vsyncpa [#allocation4], 0
    // Predicated region
    $region2: #{tpu_custom_call.1} parent=1 // pred_check
      _
    $region3: #{tpu_custom_call.1} parent=1 // pred_check_branch
      %12 = sbr.rel (0) target = $region5
    $region4: #{tpu_custom_call.1} parent=1 // pred_region
      %14 = vsyncadd [#allocation3], 0
      %s16 = sshll.u32 %s0, 4
      %s17 = int_to_ptr.hbm [resolvable:$true] %s16
      %s18 = sshll.u32 [#allocation2], 4
      %s19 = int_to_ptr.vmem [resolvable:$true] %s18
      %21 = dma.hbm_to_vmem [thread:$0]  %s17, 64, %s19, [#allocation3]
    $region5: #{tpu_custom_call.1} parent=1 // pred_fallthru
      _
    // Predicated region
    $region6: #{tpu_custom_call.1} parent=1 // pred_check
      _
    $region7: #{tpu_custom_call.1} parent=1 // pred_check_branch
      %23 = sbr.rel (0) target = $region9
    $region8: #{tpu_custom_call.1} parent=1 // pred_region
      %25 = vsyncadd [#allocation6], 0
      %s26 = sshll.u32 %s1, 4
      %s27 = int_to_ptr.hbm [resolvable:$true] %s26
      %s28 = sshll.u32 [#allocation5], 4
      %s29 = int_to_ptr.vmem [resolvable:$true] %s28
      %34 = dma.hbm_to_vmem [thread:$0]  %s27, 512, %s29, [#allocation6], 64, 64, 4
    $region9: #{tpu_custom_call.1} parent=1 // pred_fallthru
      _
    // Predicated region
    $region10: #{tpu_custom_call.1} parent=1 // pred_check
      _
    $region11: #{tpu_custom_call.1} parent=1 // pred_check_branch
      %36 = sbr.rel (0) target = $region13
    $region12: #{tpu_custom_call.1} parent=1 // pred_region
      _
    $region13: #{tpu_custom_call.1} parent=1 // pred_fallthru
      _
    // Predicated region
    $region14: #{tpu_custom_call.1} parent=1 // pred_check
      _
    $region15: #{tpu_custom_call.1} parent=1 // pred_check_branch
      %38 = sbr.rel (0) target = $region17
    $region16: #{tpu_custom_call.1} parent=1 // pred_region
      %40 = dma.done [#allocation3], 64
    $region17: #{tpu_custom_call.1} parent=1 // pred_fallthru
      _
    // Predicated region
    $region18: #{tpu_custom_call.1} parent=1 // pred_check
      _
    $region19: #{tpu_custom_call.1} parent=1 // pred_check_branch
      %42 = sbr.rel (0) target = $region21
    $region20: #{tpu_custom_call.1} parent=1 // pred_region
      %44 = dma.done [#allocation6], 512
    $region21: #{tpu_custom_call.1} parent=1 // pred_fallthru
      _
    %v46 = vld [vmem:[#allocation2] sm:$0xf]
    %v47 = vld [vmem:[#allocation5] sm:$0xf]
    %v48 = vld [vmem:[#allocation5 + $0x4] sm:$0xf]
    %v49 = vld [vmem:[#allocation5 + $0x8] sm:$0xf]
    %v50 = vld [vmem:[#allocation5 + $0xc] sm:$0xf]
    %v51 = vld [vmem:[#allocation5 + $0x10] sm:$0xf]
    %v52 = vld [vmem:[#allocation5 + $0x14] sm:$0xf]
    %v53 = vld [vmem:[#allocation5 + $0x18] sm:$0xf]
    %v54 = vld [vmem:[#allocation5 + $0x1c] sm:$0xf]
    %v55 = vld [vmem:[%s2] sm:$0x1]
    %v57 = vperm.slane %v55, 0
    %v67 = vunpack.c.l.b16 %v47
    %v68 = vunpack.c.l.b16 %v48
    %v69 = vunpack.c.l.b16 %v49
    %v70 = vunpack.c.l.b16 %v50
    %v71 = vunpack.c.l.b16 %v51
    %v72 = vunpack.c.l.b16 %v52
    %v73 = vunpack.c.l.b16 %v53
    %v74 = vunpack.c.l.b16 %v54
    %v75 = vpack.c.b16 %v68, %v67
    %v76 = vpack.c.b16 %v70, %v69
    %v77 = vpack.c.b16 %v72, %v71
    %v78 = vpack.c.b16 %v74, %v73
    %vm83 = vcmask 523264
    %v85 = vsel %vm83, %v46, 0
    %87 = vmatpush.bf16.msra.mxu0 0
    %88 = vmatpush.bf16.msra.mxu0 0
    %89 = vmatpush.bf16.msra.mxu0 0
    %90 = vmatpush.bf16.msra.mxu0 0
    %91 = vmatpush.bf16.msra.mxu0 %v78
    %92 = vmatpush.bf16.msra.mxu0 %v77
    %93 = vmatpush.bf16.msra.mxu0 %v76
    %94 = vmatpush.bf16.msra.mxu0 %v75
    %95 = vmatmul.bf16.gmra.mxu0 %v85
    %v96 = vpop.f32.mrf.mxu0
    %v97 = vadd.f32 %v57, %v96
    %v98 = vpop.f32.mrf.mxu0
    %99 = vdwg.mxu0
    %v100 = vmax.f32 %v97, 0.0
    %v101 = vpack.c.bf16 %v100, %v100
    %vm102 = vcmask 519168
    %103 = vst.msk [vmem:[#allocation7] sm:$0xf] %vm102, %v101
    // Predicated region
    $region22: #{tpu_custom_call.1} parent=1 // pred_check
      _
    $region23: #{tpu_custom_call.1} parent=1 // pred_check_branch
      %105 = sbr.rel (0) target = $region25
    $region24: #{tpu_custom_call.1} parent=1 // pred_region
      %107 = vsyncadd [#allocation4], 0
      %s109 = sshll.u32 [#allocation7], 4
      %s110 = int_to_ptr.vmem [resolvable:$true] %s109
      %s111 = sshll.u32 %s3, 4
      %s112 = int_to_ptr.hbm [resolvable:$true] %s111
      %114 = dma.vmem_to_hbm [thread:$0]  %s110, 64, %s112, [#allocation4]
    $region25: #{tpu_custom_call.1} parent=1 // pred_fallthru
      _
    // Predicated region
    $region26: #{tpu_custom_call.1} parent=1 // pred_check
      _
    $region27: #{tpu_custom_call.1} parent=1 // pred_check_branch
      %116 = sbr.rel (0) target = $region29
    $region28: #{tpu_custom_call.1} parent=1 // pred_region
      %118 = dma.done [#allocation4], 64
    $region29: #{tpu_custom_call.1} parent=1 // pred_fallthru
      _
    %119 = vsyncpa [#allocation3], 1
    %120 = vsyncpa [#allocation6], 1
    %121 = vsyncpa [#allocation4], 1

</llo_original>
